<compile_context>
chip_gen: v7x
topology: tpu7x:2x2x1
jax: 0.10.0
libtpu: 0.0.40
codegen_flags: <defaults>
</compile_context>

<pallas_src>
import jax
import jax.numpy as jnp
from jax.experimental import pallas as pl
from jax.experimental.pallas import tpu as pltpu

_LANES = 128


def _round_up(x, m):
    return (x + m - 1) // m * m


def _detect_num_tensorcores(default=2):
    """TensorCores per chip (2 on v7x, 1 on v5e/v6e).

    Any value is *correct* (a too-large value only adds a cheap serial loop,
    a too-small value only forfeits the second core), so fall back safely."""
    try:
        info = pltpu.get_tpu_info()
    except Exception:
        return default
    for name in ("num_cores", "core_count", "num_tensorcores",
                 "tensor_core_count"):
        v = getattr(info, name, None)
        if v is None:
            continue
        try:
            v = int(v)
        except Exception:
            continue
        if v >= 1:
            return max(1, min(v, 4))
    return default


def _make_kernel(tile_rows, steps, rows_valid, need_mask):
    """Build the kernel with static tiling parameters baked in."""

    def kernel(pw_ref, o_ref, t_ref, w_ref, part_ref):
        c = pl.program_id(0)   # core axis ("parallel")
        i = pl.program_id(1)   # reduction axis ("arbitrary")

        @pl.when(i == 0)
        def _():
            part_ref[...] = jnp.zeros_like(part_ref)

        pw = pw_ref[0]            # SMEM scalar (pos_weight)
        o = o_ref[...]            # (tile_rows, 128) f32
        t = t_ref[...]
        w0 = w_ref[0]             # (tile_rows, 128) — planar weights, col 0
        w1 = w_ref[1]             # (tile_rows, 128) — planar weights, col 1
        # Folded per-element term; negation and 1/n applied once in wrapper.
        s = (1.0 + pw * t) * (w0 + o * (w1 - w0))

        if need_mask:
            # Zero rows past the end of the array (partial final block) and
            # the whole contribution of clamped duplicate blocks.
            row0 = (c * steps + i) * tile_rows
            r = jax.lax.broadcasted_iota(jnp.int32, (tile_rows, _LANES), 0)
            s = jnp.where(row0 + r < rows_valid, s, 0.0)

        # Sublane reduction (XLU, free slot) into the resident output block;
        # the 128 lanes + per-core partials are summed in the wrapper.
        part_ref[...] += jnp.sum(s, axis=0, keepdims=True).reshape(1, 1, _LANES)

    return kernel


def utility_loss(outputs, targets, u_weights, pos_weight=1.0, *,
                 tile_rows=2048, min_pallas_elems=32768):
    """outputs: (N,), targets: (N,), u_weights: (N, 2) (module layout) or a
    pre-split planar (2, N). Returns scalar f32."""
    n = int(outputs.shape[0])
    outputs = jnp.asarray(outputs, jnp.float32)
    targets = jnp.asarray(targets, jnp.float32)
    u_weights = jnp.asarray(u_weights, jnp.float32)

    if u_weights.ndim == 2 and u_weights.shape[0] == n and u_weights.shape[1] == 2:
        w_planar = None                    # module layout (N, 2)
    elif u_weights.ndim == 2 and u_weights.shape == (2, n):
        w_planar = u_weights               # pre-split (2, N): zero-copy path
    else:
        raise ValueError(f"u_weights must be (N, 2) or (2, N), got "
                         f"{u_weights.shape} with N={n}")

    if n < min_pallas_elems:
        # Tiny-N fast path (~16 B/elem): fused XLA elementwise+reduce beats
        # the fixed pallas_call / per-grid-step overhead.
        if w_planar is None:
            w0, w1 = u_weights[:, 0], u_weights[:, 1]
        else:
            w0, w1 = w_planar[0], w_planar[1]
        s = (1.0 + pos_weight * targets) * (w0 + outputs * (w1 - w0))
        return -jnp.sum(s) / n

    rows = pl.cdiv(n, _LANES)
    pad = rows * _LANES - n

    # Planar weights: (2, N). Module layout needs exactly one transpose pass
    # (the only unavoidable copy); the pre-split layout needs none.
    w = u_weights.T if w_planar is None else w_planar
    if pad:
        # Zero-pad the 128-tail: w0 = w1 = 0 there -> contribution is exactly
        # 0, so no per-element tail mask is needed (only row masking below).
        outputs = jnp.pad(outputs, (0, pad))
        targets = jnp.pad(targets, (0, pad))
        w = jnp.pad(w, ((0, 0), (0, pad)))
    # Metadata-only reshapes (bitcasts) when n % 128 == 0: the kernel streams
    # outputs / targets / planar weights straight from their HBM buffers.
    o2 = outputs.reshape(rows, _LANES)
    t2 = targets.reshape(rows, _LANES)
    w3 = w.reshape(2, rows, _LANES)

    num_cores = _detect_num_tensorcores()
    tr = min(int(tile_rows), _round_up(rows, 8))
    tr = max(8, tr - tr % 8)
    total_blocks = pl.cdiv(rows, tr)
    steps = pl.cdiv(total_blocks, num_cores)
    # Mask only if the grid over-covers the rows (partial final block and/or
    # clamped duplicate blocks); otherwise skip it entirely (static decision).
    need_mask = (num_cores * steps * tr != rows)

    def blk(c, i):
        # Clamp so every DMA window overlaps the array; over-covered steps are
        # zeroed by the in-kernel row mask.
        return jnp.minimum(c * steps + i, total_blocks - 1)

    io_spec = pl.BlockSpec((tr, _LANES), lambda c, i, pw: (blk(c, i), 0))
    w_spec = pl.BlockSpec((2, tr, _LANES), lambda c, i, pw: (0, blk(c, i), 0))

    pw = jnp.full((1,), pos_weight, dtype=jnp.float32)

    parts = pl.pallas_call(
        _make_kernel(tr, steps, rows, need_mask),
        out_shape=jax.ShapeDtypeStruct((num_cores, 1, _LANES), jnp.float32),
        grid_spec=pltpu.PrefetchScalarGridSpec(
            num_scalar_prefetch=1,
            grid=(num_cores, steps),
            in_specs=[io_spec, io_spec, w_spec],
            out_specs=pl.BlockSpec((1, 1, _LANES), lambda c, i, pw: (c, 0, 0)),
        ),
        compiler_params=pltpu.CompilerParams(
            dimension_semantics=("parallel", "arbitrary"),
            vmem_limit_bytes=32 * 1024 * 1024),
        cost_estimate=pl.CostEstimate(
            flops=8 * rows * _LANES,
            transcendentals=0,
            bytes_accessed=16 * rows * _LANES + num_cores * _LANES * 4),
    )(pw, o2, t2, w3)

    # Add per-core / per-lane partials, negate, divide by the ORIGINAL n.
    return -jnp.sum(parts) / n


def _reference(outputs, targets, u_weights, pos_weight=1.0):
    outputs = outputs.astype(jnp.float32)
    targets = targets.astype(jnp.float32)
    u_weights = u_weights.astype(jnp.float32)
    loss = -((1.0 - outputs) * u_weights[:, 0] + outputs * u_weights[:, 1])
    loss = loss + pos_weight * targets * loss
    return jnp.sum(loss) / outputs.shape[0]


if __name__ == "__main__":
    key = jax.random.PRNGKey(0)
    k1, k2, k3 = jax.random.split(key, 3)

    N = 3000  # non-multiple of 128: exercises padding + partial/clamped blocks
    outputs = jax.nn.sigmoid(jax.random.normal(k1, (N,), dtype=jnp.float32))
    targets = (jax.random.uniform(k2, (N,)) > 0.5).astype(jnp.float32)
    u_weights = jax.random.normal(k3, (N, 2), dtype=jnp.float32)

    want = _reference(outputs, targets, u_weights, 1.0)

    # Force the Pallas path with tiny tiles so multiple grid steps, the
    # resident accumulator, block clamping and the row mask are exercised.
    got = jax.block_until_ready(
        utility_loss(outputs, targets, u_weights, 1.0,
                     tile_rows=8, min_pallas_elems=0))
    assert jnp.allclose(got, want, rtol=1e-4, atol=1e-6), (got, want)

    # Same compiled kernel, different pos_weight (runtime SMEM scalar).
    want2 = _reference(outputs, targets, u_weights, 2.5)
    got2 = jax.block_until_ready(
        utility_loss(outputs, targets, u_weights, 2.5,
                     tile_rows=8, min_pallas_elems=0))
    assert jnp.allclose(got2, want2, rtol=1e-4, atol=1e-6), (got2, want2)

    # Aligned N (zero-copy reshape, no row mask) and pre-split (2, N) weights.
    N2 = 2048
    o_a = jax.nn.sigmoid(jax.random.normal(k1, (N2,), dtype=jnp.float32))
    t_a = (jax.random.uniform(k2, (N2,)) > 0.5).astype(jnp.float32)
    uw_a = jax.random.normal(k3, (N2, 2), dtype=jnp.float32)
    want3 = _reference(o_a, t_a, uw_a, 1.0)
    got3 = jax.block_until_ready(
        utility_loss(o_a, t_a, uw_a, 1.0, tile_rows=8, min_pallas_elems=0))
    assert jnp.allclose(got3, want3, rtol=1e-4, atol=1e-6), (got3, want3)
    got4 = jax.block_until_ready(
        utility_loss(o_a, t_a, jnp.transpose(uw_a), 1.0,
                     tile_rows=8, min_pallas_elems=0))
    assert jnp.allclose(got4, want3, rtol=1e-4, atol=1e-6), (got4, want3)

    # Auto path (tiny N -> fused-XLA short circuit).
    got5 = jax.block_until_ready(utility_loss(outputs, targets, u_weights, 1.0))
    assert jnp.allclose(got5, want, rtol=1e-4, atol=1e-6), (got5, want)

    print("KERNEL_OK")
</pallas_src>

<mosaic_0001>
module attributes {stable_mosaic.version = 11 : i64} {
  func.func @kernel(%arg0: i32, %arg1: i32, %arg2: memref<1xf32, #tpu.memory_space<smem>>, %arg3: memref<8x128xf32, #tpu.memory_space<vmem>>, %arg4: memref<8x128xf32, #tpu.memory_space<vmem>>, %arg5: memref<2x8x128xf32, #tpu.memory_space<vmem>>, %arg6: memref<1x1x128xf32, #tpu.memory_space<vmem>>) attributes {dimension_semantics = [#tpu.dimension_semantics<parallel>, #tpu.dimension_semantics<arbitrary>], iteration_bounds = array<i64: 2, 2>, scalar_prefetch = 1 : i64, scratch_operands = 0 : i64, tpu.core_type = #tpu.core_type<tc>, window_params = [{transform_indices = @transform_0, window_bounds = array<i64: 8, 128>}, {transform_indices = @transform_1, window_bounds = array<i64: 8, 128>}, {transform_indices = @transform_2, window_bounds = array<i64: 2, 8, 128>}, {transform_indices = @transform_3, window_bounds = array<i64: 1, 1, 128>}]} {
    %c0_i32 = arith.constant 0 : i32
    %0 = arith.cmpi eq, %arg1, %c0_i32 : i32
    %1 = arith.extui %0 : i1 to i32
    %c0_i32_0 = arith.constant 0 : i32
    %2 = arith.cmpi ne, %1, %c0_i32_0 : i32
    scf.if %2 {
      %cst_18 = arith.constant 0.000000e+00 : f32
      %34 = vector.broadcast %cst_18 : f32 to vector<1x1x128xf32>
      %c0_19 = arith.constant 0 : index
      %c0_20 = arith.constant 0 : index
      %c0_21 = arith.constant 0 : index
      %35 = vector.load %arg6[%c0_19, %c0_20, %c0_21] : memref<1x1x128xf32, #tpu.memory_space<vmem>>, vector<1x1x128xf32>
      tpu.vector_store %arg6[%c0_19, %c0_20, %c0_21], %34 {strides = array<i32>} : memref<1x1x128xf32, #tpu.memory_space<vmem>>, vector<1x1x128xf32>,
    } else {
    }
    %c0 = arith.constant 0 : index
    %3 = memref.load %arg2[%c0] : memref<1xf32, #tpu.memory_space<smem>>
    %c0_1 = arith.constant 0 : index
    %c0_2 = arith.constant 0 : index
    %4 = vector.load %arg3[%c0_1, %c0_2] : memref<8x128xf32, #tpu.memory_space<vmem>>, vector<8x128xf32>
    %c0_3 = arith.constant 0 : index
    %c0_4 = arith.constant 0 : index
    %5 = vector.load %arg4[%c0_3, %c0_4] : memref<8x128xf32, #tpu.memory_space<vmem>>, vector<8x128xf32>
    %c0_5 = arith.constant 0 : index
    %c0_6 = arith.constant 0 : index
    %c0_7 = arith.constant 0 : index
    %6 = vector.load %arg5[%c0_5, %c0_6, %c0_7] : memref<2x8x128xf32, #tpu.memory_space<vmem>>, vector<1x8x128xf32>
    %7 = vector.shape_cast %6 : vector<1x8x128xf32> to vector<8x128xf32>
    %c1 = arith.constant 1 : index
    %c0_8 = arith.constant 0 : index
    %c0_9 = arith.constant 0 : index
    %8 = vector.load %arg5[%c1, %c0_8, %c0_9] : memref<2x8x128xf32, #tpu.memory_space<vmem>>, vector<1x8x128xf32>
    %9 = vector.shape_cast %8 : vector<1x8x128xf32> to vector<8x128xf32>
    %10 = vector.broadcast %3 : f32 to vector<8x128xf32>
    %11 = arith.mulf %10, %5 : vector<8x128xf32>
    %cst = arith.constant 1.000000e+00 : f32
    %12 = vector.broadcast %cst : f32 to vector<8x128xf32>
    %13 = arith.addf %12, %11 : vector<8x128xf32>
    %14 = arith.subf %9, %7 : vector<8x128xf32>
    %15 = arith.mulf %4, %14 : vector<8x128xf32>
    %16 = arith.addf %7, %15 : vector<8x128xf32>
    %17 = arith.mulf %13, %16 : vector<8x128xf32>
    %c2_i32 = arith.constant 2 : i32
    %18 = arith.muli %arg0, %c2_i32 : i32
    %19 = arith.addi %18, %arg1 : i32
    %c8_i32 = arith.constant 8 : i32
    %20 = arith.muli %19, %c8_i32 : i32
    %21 = tpu.iota {dimensions = array<i32: 0>} : vector<8x128xi32>
    %22 = vector.broadcast %20 : i32 to vector<8x128xi32>
    %23 = arith.addi %22, %21 : vector<8x128xi32>
    %c24_i32 = arith.constant 24 : i32
    %24 = vector.broadcast %c24_i32 : i32 to vector<8x128xi32>
    %25 = arith.cmpi slt, %23, %24 : vector<8x128xi32>
    %cst_10 = arith.constant 0.000000e+00 : f32
    %26 = vector.broadcast %cst_10 : f32 to vector<8x128xf32>
    %27 = arith.select %25, %17, %26 : vector<8x128xi1>, vector<8x128xf32>
    %c0_11 = arith.constant 0 : index
    %c0_12 = arith.constant 0 : index
    %c0_13 = arith.constant 0 : index
    %28 = vector.load %arg6[%c0_11, %c0_12, %c0_13] : memref<1x1x128xf32, #tpu.memory_space<vmem>>, vector<1x1x128xf32>
    %cst_14 = arith.constant dense<0.000000e+00> : vector<128xf32>
    %29 = vector.multi_reduction <add>, %27, %cst_14 [0] : vector<8x128xf32> to vector<128xf32>
    %30 = vector.shape_cast %29 : vector<128xf32> to vector<1x128xf32>
    %31 = vector.shape_cast %30 : vector<1x128xf32> to vector<1x1x128xf32>
    %32 = arith.addf %28, %31 : vector<1x1x128xf32>
    %c0_15 = arith.constant 0 : index
    %c0_16 = arith.constant 0 : index
    %c0_17 = arith.constant 0 : index
    %33 = vector.load %arg6[%c0_15, %c0_16, %c0_17] : memref<1x1x128xf32, #tpu.memory_space<vmem>>, vector<1x1x128xf32>
    tpu.vector_store %arg6[%c0_15, %c0_16, %c0_17], %32 {strides = array<i32>} : memref<1x1x128xf32, #tpu.memory_space<vmem>>, vector<1x1x128xf32>,
    return
  }
  func.func @transform_0(%arg0: i32, %arg1: i32, %arg2: memref<1xf32, #tpu.memory_space<smem>>) -> (i32, i32) {
    %c2_i32 = arith.constant 2 : i32
    %0 = arith.muli %arg0, %c2_i32 : i32
    %1 = arith.addi %0, %arg1 : i32
    %c2_i32_0 = arith.constant 2 : i32
    %2 = arith.minsi %1, %c2_i32_0 : i32
    %c0_i32 = arith.constant 0 : i32
    %c0_i32_1 = arith.constant 0 : i32
    return %2, %c0_i32 : i32, i32
  }
  func.func @transform_1(%arg0: i32, %arg1: i32, %arg2: memref<1xf32, #tpu.memory_space<smem>>) -> (i32, i32) {
    %c2_i32 = arith.constant 2 : i32
    %0 = arith.muli %arg0, %c2_i32 : i32
    %1 = arith.addi %0, %arg1 : i32
    %c2_i32_0 = arith.constant 2 : i32
    %2 = arith.minsi %1, %c2_i32_0 : i32
    %c0_i32 = arith.constant 0 : i32
    %c0_i32_1 = arith.constant 0 : i32
    return %2, %c0_i32 : i32, i32
  }
  func.func @transform_2(%arg0: i32, %arg1: i32, %arg2: memref<1xf32, #tpu.memory_space<smem>>) -> (i32, i32, i32) {
    %c2_i32 = arith.constant 2 : i32
    %0 = arith.muli %arg0, %c2_i32 : i32
    %1 = arith.addi %0, %arg1 : i32
    %c2_i32_0 = arith.constant 2 : i32
    %2 = arith.minsi %1, %c2_i32_0 : i32
    %c0_i32 = arith.constant 0 : i32
    %c0_i32_1 = arith.constant 0 : i32
    %c0_i32_2 = arith.constant 0 : i32
    return %c0_i32, %2, %c0_i32_1 : i32, i32, i32
  }
  func.func @transform_3(%arg0: i32, %arg1: i32, %arg2: memref<1xf32, #tpu.memory_space<smem>>) -> (i32, i32, i32) {
    %c0_i32 = arith.constant 0 : i32
    %c0_i32_0 = arith.constant 0 : i32
    %c0_i32_1 = arith.constant 0 : i32
    return %arg0, %c0_i32, %c0_i32_0 : i32, i32, i32
  }
}

</mosaic_0001>

<llo_original>
// kernel: tpu_custom_call.1
$region0: #{tpu_custom_call.1}
  #allocation0 [shape = 'u32[]', space=smem, size = 0x4, offset = 0x4, fixed_abs, tag = 'smem constant byte address 0x4 - core index']
  #allocation1 [shape = 'u32[144,128]{1,0:T(1,128)}', space=vmem, size = 0x12000, scoped, tag = 'internal scratch']
  #allocation2 [shape = 's32[1]{0}', space=sflag, size = 0x4, scoped, tag = 'scoped memory for tpu_custom_call.1']
  #allocation3 [shape = 'f32[1]{0:T(128)S(6)}', space=smem, size = 0x200, scoped, tag = 'prefetched SMEM operand 0']
  %s0 = inlined_call_operand.<no memory space> [shape: f32[1], index: 0, kind: input, shape index: {}]
  %s1 = inlined_call_operand.hbm [shape: f32[24,128], index: 1, kind: input, shape index: {}]
  %s2 = inlined_call_operand.hbm [shape: f32[24,128], index: 2, kind: input, shape index: {}]
  %s3 = inlined_call_operand.hbm [shape: f32[2,24,128], index: 3, kind: input, shape index: {}]
  %s4 = inlined_call_operand.hbm [shape: f32[2,1,128], index: 4, kind: output, shape index: {}]
  %s5 = sld [smem:[#allocation0]]
  $region61: #{tpu_custom_call.1} parent=0
    _
  %s7 = ssub.s32 1, %s5
  %s8 = scalar_select 0, %s7, %s5
  %9 = sst [smem:[#allocation3]] %s0
  $region1: #{tpu_custom_call.1} parent=0
    #allocation4 [shape = 'u8[8192]{0}', space=vmem, size = 0x2000, scoped, tag = 'input window, operand 1']
    #allocation5 [shape = 's32[2]{0}', space=sflag, size = 0x8, scoped, tag = 'scoped memory for tpu_custom_call.1']
    #allocation6 [shape = 's32[2]{0}', space=sflag, size = 0x8, scoped, tag = 'scoped memory for tpu_custom_call.1']
    #allocation7 [shape = 'u8[8192]{0}', space=vmem, size = 0x2000, scoped, tag = 'input window, operand 2']
    #allocation8 [shape = 's32[2]{0}', space=sflag, size = 0x8, scoped, tag = 'scoped memory for tpu_custom_call.1']
    #allocation9 [shape = 'u8[16384]{0}', space=vmem, size = 0x4000, scoped, tag = 'input window, operand 3']
    #allocation10 [shape = 'u8[1024]{0}', space=vmem, size = 0x400, scoped, tag = 'output window, operand 0']
    %10 = vsyncpa [#allocation5], 0
    %s11 = scalar_lea.sflag [#allocation5], 1
    %12 = vsyncpa %s11, 0
    %13 = vsyncpa [#allocation8], 0
    %s14 = scalar_lea.sflag [#allocation8], 1
    %15 = vsyncpa %s14, 0
    %16 = vsyncpa [#allocation6], 0
    %s17 = scalar_lea.sflag [#allocation6], 1
    %18 = vsyncpa %s17, 0
    loop: start=0, step=1, limit=6
    $region2: #{tpu_custom_call.1} parent=1 // loop_pre_header
      _
    $region3: #{tpu_custom_call.1} parent=1 // loop_header
      %s20 = sphi 0, %s24
      %p21 = scmp.ge.s32.totalorder %s20, 6
      %s27 = sphi 0, %s39
      %s28 = sphi 0, %s35
      %s29 = sphi 0, %s27
      %s30 = sphi 0, %s28
      %s31 = sphi 0, %s29
      %s32 = sphi 0, %s30
      %s50 = sphi 0, %s52
      %s53 = sphi 0, %s50
      %s54 = sphi 0, %s53
      %s70 = sphi 0, %s54
      %s84 = sphi 0, %s86
      %s87 = sphi 0, %s84
      %s88 = sphi 0, %s87
      %s104 = sphi 0, %s88
      %s118 = sphi 0, %s120
      %s121 = sphi 0, %s118
      %s122 = sphi 0, %s121
      %s138 = sphi 0, %s122
      %s144 = sphi 0, %s146
      %s147 = sphi 0, %s144
      %s148 = sphi 0, %s147
      %s164 = sphi 0, %s148
    $region4: #{tpu_custom_call.1} parent=1 // loop_header_branch
      %23 = sbr.rel (%p21) target = $region8
    $region5: #{tpu_custom_call.1} parent=1 // loop_body
      %s25 = ssub.s32 %s20, 1
      %s26 = ssub.s32 %s20, 2
      %s33 = sadd.s32 1, %s28
      %p34 = scmp.ge.s32.totalorder %s33, 2
      %s35 = scalar_select %p34, 0, %s33
      %s36 = sadd.s32 1, %s27
      %s37 = scalar_select %p34, %s36, %s27
      %p38 = scmp.ge.s32.totalorder %s37, 2
      %s39 = scalar_select %p38, 0, %s37
      %s40 = smul.u32 %s27, 2
      %s41 = sadd.s32 %s40, %s28
      %p42 = scmp.lt.s32.totalorder %s41, 2
      %s43 = scalar_select %p42, %s41, 2
      %s44 = smul.u32 %s39, 2
      %s45 = sadd.s32 %s44, %s35
      %p46 = scmp.lt.s32.totalorder %s45, 2
      %s47 = scalar_select %p46, %s45, 2
      %s48 = ssub.s32 %s43, %s47
      %p49 = scmp.eq.s32.totalorder %s48, 0
      %s51 = sadd.s32 %s50, 1
      %s52 = scalar_select %p49, %s50, %s51
      %p55 = pneg %p49
      %p56 = scmp.eq.s32.totalorder %s20, 3
      %p57 = por %p55, %p56
      %p58 = scmp.ne.s32.totalorder %s50, %s53
      %p59 = scmp.eq.s32.totalorder %s20, 0
      %p60 = por %p58, %p59
      %p61 = scmp.ne.s32.totalorder %s50, %s53
      %p62 = scmp.eq.s32.totalorder %s25, 3
      %p63 = por %p61, %p62
      %p64 = scmp.ne.s32.totalorder %s53, %s54
      %p65 = scmp.eq.s32.totalorder %s25, 0
      %p66 = por %p64, %p65
      %p67 = scmp.ne.s32.totalorder %s53, %s54
      %p68 = scmp.eq.s32.totalorder %s26, 3
      %p69 = por %p67, %p68
      %p71 = scmp.ne.s32.totalorder %s54, %s70
      %p72 = scmp.eq.s32.totalorder %s26, 0
      %p73 = por %p71, %p72
      %s74 = smul.u32 %s27, 2
      %s75 = sadd.s32 %s74, %s28
      %p76 = scmp.lt.s32.totalorder %s75, 2
      %s77 = scalar_select %p76, %s75, 2
      %s78 = smul.u32 %s39, 2
      %s79 = sadd.s32 %s78, %s35
      %p80 = scmp.lt.s32.totalorder %s79, 2
      %s81 = scalar_select %p80, %s79, 2
      %s82 = ssub.s32 %s77, %s81
      %p83 = scmp.eq.s32.totalorder %s82, 0
      %s85 = sadd.s32 %s84, 1
      %s86 = scalar_select %p83, %s84, %s85
      %p89 = pneg %p83
      %p90 = scmp.eq.s32.totalorder %s20, 3
      %p91 = por %p89, %p90
      %p92 = scmp.ne.s32.totalorder %s84, %s87
      %p93 = scmp.eq.s32.totalorder %s20, 0
      %p94 = por %p92, %p93
      %p95 = scmp.ne.s32.totalorder %s84, %s87
      %p96 = scmp.eq.s32.totalorder %s25, 3
      %p97 = por %p95, %p96
      %p98 = scmp.ne.s32.totalorder %s87, %s88
      %p99 = scmp.eq.s32.totalorder %s25, 0
      %p100 = por %p98, %p99
      %p101 = scmp.ne.s32.totalorder %s87, %s88
      %p102 = scmp.eq.s32.totalorder %s26, 3
      %p103 = por %p101, %p102
      %p105 = scmp.ne.s32.totalorder %s88, %s104
      %p106 = scmp.eq.s32.totalorder %s26, 0
      %p107 = por %p105, %p106
      %s108 = smul.u32 %s27, 2
      %s109 = sadd.s32 %s108, %s28
      %p110 = scmp.lt.s32.totalorder %s109, 2
      %s111 = scalar_select %p110, %s109, 2
      %s112 = smul.u32 %s39, 2
      %s113 = sadd.s32 %s112, %s35
      %p114 = scmp.lt.s32.totalorder %s113, 2
      %s115 = scalar_select %p114, %s113, 2
      %s116 = ssub.s32 %s111, %s115
      %p117 = scmp.eq.s32.totalorder %s116, 0
      %s119 = sadd.s32 %s118, 1
      %s120 = scalar_select %p117, %s118, %s119
      %p123 = pneg %p117
      %p124 = scmp.eq.s32.totalorder %s20, 3
      %p125 = por %p123, %p124
      %p126 = scmp.ne.s32.totalorder %s118, %s121
      %p127 = scmp.eq.s32.totalorder %s20, 0
      %p128 = por %p126, %p127
      %p129 = scmp.ne.s32.totalorder %s118, %s121
      %p130 = scmp.eq.s32.totalorder %s25, 3
      %p131 = por %p129, %p130
      %p132 = scmp.ne.s32.totalorder %s121, %s122
      %p133 = scmp.eq.s32.totalorder %s25, 0
      %p134 = por %p132, %p133
      %p135 = scmp.ne.s32.totalorder %s121, %s122
      %p136 = scmp.eq.s32.totalorder %s26, 3
      %p137 = por %p135, %p136
      %p139 = scmp.ne.s32.totalorder %s122, %s138
      %p140 = scmp.eq.s32.totalorder %s26, 0
      %p141 = por %p139, %p140
      %s142 = ssub.s32 %s27, %s39
      %p143 = scmp.eq.s32.totalorder %s142, 0
      %s145 = sadd.s32 %s144, 1
      %s146 = scalar_select %p143, %s144, %s145
      %p149 = pneg %p143
      %p150 = scmp.eq.s32.totalorder %s20, 3
      %p151 = por %p149, %p150
      %p152 = scmp.ne.s32.totalorder %s144, %s147
      %p153 = scmp.eq.s32.totalorder %s20, 0
      %p154 = por %p152, %p153
      %p155 = scmp.ne.s32.totalorder %s144, %s147
      %p156 = scmp.eq.s32.totalorder %s25, 3
      %p157 = por %p155, %p156
      %p158 = scmp.ne.s32.totalorder %s147, %s148
      %p159 = scmp.eq.s32.totalorder %s25, 0
      %p160 = por %p158, %p159
      %p161 = scmp.ne.s32.totalorder %s147, %s148
      %p162 = scmp.eq.s32.totalorder %s26, 3
      %p163 = por %p161, %p162
      %p165 = scmp.ne.s32.totalorder %s148, %s164
      %p166 = scmp.eq.s32.totalorder %s26, 0
      %p167 = por %p165, %p166
      %p168 = scmp.le.s32.totalorder 1, %s20
      %p169 = scmp.lt.s32.totalorder %s20, 5
      %p170 = pnand %p168, %p169
      %p171 = pneg %p170
      // Predicated region
      $region9: #{tpu_custom_call.1} parent=5 // pred_check
        _
      $region10: #{tpu_custom_call.1} parent=5 // pred_check_branch
        %173 = sbr.rel (%p170) target = $region12
      $region11: #{tpu_custom_call.1} parent=5 // pred_region
        %s174 = ssub.s32 %s20, 1
      $region12: #{tpu_custom_call.1} parent=5 // pred_fallthru
        _
      %p175 = scmp.lt.s32.totalorder %s20, 4
      // Predicated region
      $region13: #{tpu_custom_call.1} parent=5 // pred_check
        %p176 = pneg %p175
      $region14: #{tpu_custom_call.1} parent=5 // pred_check_branch
        %178 = sbr.rel (%p176) target = $region16
      $region15: #{tpu_custom_call.1} parent=5 // pred_region
        // Predicated region
        $region17: #{tpu_custom_call.1} parent=15 // pred_check
          %p179 = pneg %p60
        $region18: #{tpu_custom_call.1} parent=15 // pred_check_branch
          %181 = sbr.rel (%p179) target = $region20
        $region19: #{tpu_custom_call.1} parent=15 // pred_region
          %s182 = sand.u32 %s50, 1
          %s183 = scalar_lea.sflag [#allocation5], %s182
          %s184 = sand.u32 %s50, 1
          %s185 = smul.addr %s184, 8
          %s186 = scalar_lea.vmem [#allocation4], %s185
          %s187 = smul.u32 %s27, 2
          %s188 = sadd.s32 %s187, %s28
          %p189 = scmp.lt.s32.totalorder %s188, 2
          %s190 = scalar_select %p189, %s188, 2
          %s192 = ssub.s32 128, 128
          %193 = vsyncadd %s183, %s192
          %s194 = smul.addr %s190, 128
          %s195 = scalar_lea.hbm %s1, %s194
          %s197 = sshll.u32 %s186, 4
          %s198 = int_to_ptr.vmem [resolvable:$true] %s197
          %200 = dma.hbm_to_vmem [thread:$0]  %s195, 128, %s198, %s183
        $region20: #{tpu_custom_call.1} parent=15 // pred_fallthru
          _
        // Predicated region
        $region21: #{tpu_custom_call.1} parent=15 // pred_check
          %p201 = pneg %p94
        $region22: #{tpu_custom_call.1} parent=15 // pred_check_branch
          %203 = sbr.rel (%p201) target = $region24
        $region23: #{tpu_custom_call.1} parent=15 // pred_region
          %s204 = sand.u32 %s20, 1
          %s205 = scalar_lea.sflag [#allocation8], %s204
          %s206 = sand.u32 %s84, 1
          %s207 = smul.addr %s206, 8
          %s208 = scalar_lea.vmem [#allocation7], %s207
          %s209 = smul.u32 %s27, 2
          %s210 = sadd.s32 %s209, %s28
          %p211 = scmp.lt.s32.totalorder %s210, 2
          %s212 = scalar_select %p211, %s210, 2
          %s214 = ssub.s32 128, 128
          %215 = vsyncadd %s205, %s214
          %s216 = smul.addr %s212, 128
          %s217 = scalar_lea.hbm %s2, %s216
          %s219 = sshll.u32 %s208, 4
          %s220 = int_to_ptr.vmem [resolvable:$true] %s219
          %222 = dma.hbm_to_vmem [thread:$0]  %s217, 128, %s220, %s205
        $region24: #{tpu_custom_call.1} parent=15 // pred_fallthru
          _
        // Predicated region
        $region25: #{tpu_custom_call.1} parent=15 // pred_check
          %p223 = pneg %p128
        $region26: #{tpu_custom_call.1} parent=15 // pred_check_branch
          %225 = sbr.rel (%p223) target = $region28
        $region27: #{tpu_custom_call.1} parent=15 // pred_region
          %s226 = sand.u32 %s20, 1
          %s227 = scalar_lea.sflag [#allocation8], %s226
          %s228 = sand.u32 %s118, 1
          %s229 = smul.addr %s228, 16
          %s230 = scalar_lea.vmem [#allocation9], %s229
          %s231 = smul.u32 %s27, 2
          %s232 = sadd.s32 %s231, %s28
          %p233 = scmp.lt.s32.totalorder %s232, 2
          %s234 = scalar_select %p233, %s232, 2
          %s236 = ssub.s32 256, 256
          %237 = vsyncadd %s227, %s236
          %s238 = smul.addr %s234, 128
          %s239 = scalar_lea.hbm %s3, %s238
          %s240 = sshll.u32 %s230, 4
          %s241 = int_to_ptr.vmem [resolvable:$true] %s240
          %246 = dma.hbm_to_vmem [thread:$0]  %s239, 256, %s241, %s227, 384, 128, 8
        $region28: #{tpu_custom_call.1} parent=15 // pred_fallthru
          _
      $region16: #{tpu_custom_call.1} parent=5 // pred_fallthru
        _
      %p247 = scmp.le.s32.totalorder 1, %s20
      %p248 = scmp.lt.s32.totalorder %s20, 5
      %p249 = pnand %p247, %p248
      %p250 = pneg %p249
      // Predicated region
      $region29: #{tpu_custom_call.1} parent=5 // pred_check
        _
      $region30: #{tpu_custom_call.1} parent=5 // pred_check_branch
        %252 = sbr.rel (%p249) target = $region32
      $region31: #{tpu_custom_call.1} parent=5 // pred_region
        %s253 = ssub.s32 %s20, 1
        %s254 = sand.u32 %s53, 1
        %s255 = scalar_lea.sflag [#allocation5], %s254
        %s256 = sand.u32 %s53, 1
        %s257 = smul.addr %s256, 8
        %s258 = scalar_lea.vmem [#allocation4], %s257
        // Predicated region
        $region33: #{tpu_custom_call.1} parent=31 // pred_check
          %p259 = pneg %p66
        $region34: #{tpu_custom_call.1} parent=31 // pred_check_branch
          %261 = sbr.rel (%p259) target = $region36
        $region35: #{tpu_custom_call.1} parent=31 // pred_region
          %262 = dma.done %s255, 128
        $region36: #{tpu_custom_call.1} parent=31 // pred_fallthru
          _
        %s263 = sand.u32 %s25, 1
        %s264 = scalar_lea.sflag [#allocation8], %s263
        %s265 = sand.u32 %s87, 1
        %s266 = smul.addr %s265, 8
        %s267 = scalar_lea.vmem [#allocation7], %s266
        // Predicated region
        $region37: #{tpu_custom_call.1} parent=31 // pred_check
          %p268 = pneg %p100
        $region38: #{tpu_custom_call.1} parent=31 // pred_check_branch
          %270 = sbr.rel (%p268) target = $region40
        $region39: #{tpu_custom_call.1} parent=31 // pred_region
          %271 = dma.done %s264, 128
        $region40: #{tpu_custom_call.1} parent=31 // pred_fallthru
          _
        %s272 = sand.u32 %s25, 1
        %s273 = scalar_lea.sflag [#allocation8], %s272
        %s274 = sand.u32 %s121, 1
        %s275 = smul.addr %s274, 16
        %s276 = scalar_lea.vmem [#allocation9], %s275
        // Predicated region
        $region41: #{tpu_custom_call.1} parent=31 // pred_check
          %p277 = pneg %p134
        $region42: #{tpu_custom_call.1} parent=31 // pred_check_branch
          %279 = sbr.rel (%p277) target = $region44
        $region43: #{tpu_custom_call.1} parent=31 // pred_region
          %280 = dma.done %s273, 256
        $region44: #{tpu_custom_call.1} parent=31 // pred_fallthru
          _
        %s281 = sand.u32 %s53, 1
        %s282 = scalar_lea.sflag [#allocation5], %s281
        %s283 = sand.u32 %s53, 1
        %s284 = smul.addr %s283, 8
        %s285 = scalar_lea.vmem [#allocation4], %s284
        %p286 = pneg %p66
        %p287 = pneg %p63
        %s288 = sand.u32 %s25, 1
        %s289 = scalar_lea.sflag [#allocation8], %s288
        %s290 = sand.u32 %s87, 1
        %s291 = smul.addr %s290, 8
        %s292 = scalar_lea.vmem [#allocation7], %s291
        %p293 = pneg %p100
        %p294 = pneg %p97
        %s295 = sand.u32 %s25, 1
        %s296 = scalar_lea.sflag [#allocation8], %s295
        %s297 = sand.u32 %s121, 1
        %s298 = smul.addr %s297, 16
        %s299 = scalar_lea.vmem [#allocation9], %s298
        %p300 = pneg %p134
        %p301 = pneg %p131
        %p302 = pneg %p160
        %p303 = pneg %p157
        %s304 = sand.u32 %s147, 1
        %s305 = scalar_lea.sflag [#allocation6], %s304
        %s306 = sand.u32 %s147, 1
        %s307 = scalar_lea.vmem [#allocation10], %s306
        %s308 = smul.u32 %s29, 2
        %s309 = sadd.s32 %s308, %s30
        %p310 = scmp.lt.s32.totalorder %s309, 2
        %s311 = scalar_select %p310, %s309, 2
        %s312 = smul.u32 %s29, 2
        %s313 = sadd.s32 %s312, %s30
        %p314 = scmp.lt.s32.totalorder %s313, 2
        %s315 = scalar_select %p314, %s313, 2
        %s316 = smul.u32 %s29, 2
        %s317 = sadd.s32 %s316, %s30
        %p318 = scmp.lt.s32.totalorder %s317, 2
        %s319 = scalar_select %p318, %s317, 2
        %p320 = scmp.eq.s32.totalorder %s30, 0
        // Predicated region
        $region45: #{tpu_custom_call.1} parent=31 // pred_check
          %p321 = pneg %p320
        $region46: #{tpu_custom_call.1} parent=31 // pred_check_branch
          %323 = sbr.rel (%p321) target = $region48
        $region47: #{tpu_custom_call.1} parent=31 // pred_region
          %324 = vst [vmem:[%s307] sm:$0x1] 0.0
        $region48: #{tpu_custom_call.1} parent=31 // pred_fallthru
          _
        %s325 = sld [smem:[#allocation3]]
        %v326 = vld [vmem:[%s258] sm:$0xff]
        %v327 = vld [vmem:[%s267] sm:$0xff]
        %v328 = vld [vmem:[%s276] sm:$0xff]
        %s329 = scalar_lea.vmem %s276, 8 [#allocation9]
        %v330 = vld [vmem:[%s329] sm:$0xff]
        %v331 = vstv %s325
        %v332 = vmul.f32 %v331, %v327
        %v333 = vadd.f32 %v332, 1.0
        %v334 = vsub.f32 %v330, %v328
        %v335 = vmul.f32 %v326, %v334
        %v336 = vadd.f32 %v328, %v335
        %v337 = vmul.f32 %v333, %v336
        %s338 = smul.u32 %s29, 2
        %s339 = sadd.s32 %s338, %s30
        %s340 = smul.u32 %s339, 8
        %v341 = vlaneseq
        %v342 = vshrl.u32 %v341, 7
        %v343 = vstv %s340
        %v344 = vadd.s32 %v343, %v342
        %vm345 = vcmp.lt.s32.totalorder %v344, 24
        %v346 = vsel %vm345, %v337, 0.0
        %v347 = vld [vmem:[%s307] sm:$0x1]
        %v348 = vrot.slane %v346, 4
        %v349 = vadd.f32 %v346, %v348
        %v350 = vrot.slane %v349, 2
        %v351 = vadd.f32 %v349, %v350
        %v352 = vrot.slane %v351, 1
        %v353 = vadd.f32 %v351, %v352
        %v354 = vadd.f32 %v347, %v353
        %355 = vst [vmem:[%s307] sm:$0x1] %v354
        %s356 = sand.u32 %s147, 1
        %s357 = scalar_lea.sflag [#allocation6], %s356
        %s358 = sand.u32 %s147, 1
        %s359 = scalar_lea.vmem [#allocation10], %s358
        // Predicated region
        $region49: #{tpu_custom_call.1} parent=31 // pred_check
          %p360 = pneg %p157
        $region50: #{tpu_custom_call.1} parent=31 // pred_check_branch
          %362 = sbr.rel (%p360) target = $region52
        $region51: #{tpu_custom_call.1} parent=31 // pred_region
          %s364 = ssub.s32 16, 16
          %365 = vsyncadd %s357, %s364
          %s366 = smul.addr %s29, 16
          %s367 = scalar_lea.hbm %s4, %s366
          %s369 = sshll.u32 %s359, 4
          %s370 = int_to_ptr.vmem [resolvable:$true] %s369
          %372 = dma.vmem_to_hbm [thread:$0]  %s370, 16, %s367, %s357
        $region52: #{tpu_custom_call.1} parent=31 // pred_fallthru
          _
      $region32: #{tpu_custom_call.1} parent=5 // pred_fallthru
        _
      %p373 = scmp.le.s32.totalorder 2, %s20
      // Predicated region
      $region53: #{tpu_custom_call.1} parent=5 // pred_check
        %p374 = pneg %p373
      $region54: #{tpu_custom_call.1} parent=5 // pred_check_branch
        %376 = sbr.rel (%p374) target = $region56
      $region55: #{tpu_custom_call.1} parent=5 // pred_region
        %s377 = ssub.s32 %s20, 2
        // Predicated region
        $region57: #{tpu_custom_call.1} parent=55 // pred_check
          %p378 = pneg %p163
        $region58: #{tpu_custom_call.1} parent=55 // pred_check_branch
          %380 = sbr.rel (%p378) target = $region60
        $region59: #{tpu_custom_call.1} parent=55 // pred_region
          %s381 = sand.u32 %s148, 1
          %s382 = scalar_lea.sflag [#allocation6], %s381
          %s383 = sand.u32 %s148, 1
          %s384 = scalar_lea.vmem [#allocation10], %s383
          %385 = dma.done %s382, 16
        $region60: #{tpu_custom_call.1} parent=55 // pred_fallthru
          _
      $region56: #{tpu_custom_call.1} parent=5 // pred_fallthru
        _
    $region6: #{tpu_custom_call.1} parent=1 // loop_footer
      %s24 = sadd.s32 1, %s20
    $region7: #{tpu_custom_call.1} parent=1 // loop_footer_branch
      %19 = sbr.rel target = $region3
    $region8: #{tpu_custom_call.1} parent=1 // loop_exit
      _
    %386 = vsyncpa [#allocation5], 1
    %s387 = scalar_lea.sflag [#allocation5], 1
    %388 = vsyncpa %s387, 1
    %389 = vsyncpa [#allocation8], 1
    %s390 = scalar_lea.sflag [#allocation8], 1
    %391 = vsyncpa %s390, 1
    %392 = vsyncpa [#allocation6], 1
    %s393 = scalar_lea.sflag [#allocation6], 1
    %394 = vsyncpa %s393, 1

</llo_original>
